<compile_context>
chip_gen: v5e
topology: v5e:2x2
jax: 0.10.0
libtpu: 0.0.40
codegen_flags: <defaults>
</compile_context>

<pallas_src>
import math
from functools import partial

import jax
import jax.numpy as jnp
import numpy as np
from jax.experimental import pallas as pl
from jax.experimental.pallas import tpu as pltpu


# ----------------------------------------------------------------------------
# "module init": build the PE buffer exactly like the PyTorch __init__
# ----------------------------------------------------------------------------
def make_pe_buffer(d_model: int, max_len: int = 1024, dtype=jnp.float32) -> jnp.ndarray:
    position = jnp.arange(0, max_len, dtype=jnp.float32)[:, None]          # (L, 1)
    div_term = jnp.exp(
        jnp.arange(0, d_model, 2, dtype=jnp.float32) * (-math.log(10000.0) / d_model)
    )                                                                       # (E/2,)
    pe = jnp.zeros((max_len, d_model), dtype=jnp.float32)
    pe = pe.at[:, 0::2].set(jnp.sin(position * div_term))
    pe = pe.at[:, 1::2].set(jnp.cos(position * div_term))
    # pe.unsqueeze(0).transpose(0, 1)  ->  (max_len, 1, d_model)
    # Stored in the compute dtype (hoists the per-forward astype).
    return pe[:, None, :].astype(dtype)


# ----------------------------------------------------------------------------
# Pallas kernel: out = src + pe  (pe broadcast over the batch axis)
#   src_ref / out_ref : (tile_seq, B*E)   lane-dense 2D blocks
#   pe_ref            : (tile_seq, E)
# ----------------------------------------------------------------------------
def pe_add_kernel(src_ref, pe_ref, out_ref, *, batch: int):
    pe = pe_ref[...]                                   # (TS, E)
    if batch > 1:
        pe = jnp.tile(pe, (1, batch))                  # (TS, B*E): [pe, pe, ...]
    out_ref[...] = (src_ref[...] + pe.astype(src_ref.dtype)).astype(out_ref.dtype)


def positional_encoding_forward(
    src: jnp.ndarray,
    pe_buf: jnp.ndarray,
    dropout_p: float = 0.0,
    *,
    tile_seq: int | None = None,
    min_pallas_bytes: int = 1 << 20,
    donate_src: bool = False,
) -> jnp.ndarray:
    """Equivalent of PositionalEncoding.forward(src) with src of shape (S, B, E)."""
    if dropout_p != 0.0:
        # TODO(synk): implement dropout via pltpu.prng_seed/prng_random_bits masking.
        raise NotImplementedError("dropout_p > 0 is not implemented (module default is 0.0)")

    S, B, E = src.shape
    max_len = pe_buf.shape[0]
    if S > max_len:
        raise ValueError(f"sequence length {S} exceeds PE buffer max_len {max_len}")

    dsize = jnp.dtype(src.dtype).itemsize
    BE = B * E

    # PE slice as a lane-dense 2D (S, E) array in the compute dtype.
    # (No-op cast when pe_buf was built with dtype=src.dtype at init.)
    pe2d = pe_buf[:S, 0, :].astype(src.dtype)

    def xla_add():
        return src + pe2d[:, None, :]

    # Tiny inputs: the ~0.35 us/step pipeline + call overhead dominates; let
    # XLA fuse the elementwise add instead.
    if S * BE * dsize < min_pallas_bytes:
        return xla_add()

    # Lane-dense 2D view: (S, B, E) -> (S, B*E); free for contiguous arrays.
    src2d = src.reshape(S, BE)

    # Padding-aware per-row physical bytes (lane rounded up to 128).
    lane_pad = max(BE, ((BE + 127) // 128) * 128)
    pe_lane_pad = max(E, ((E + 127) // 128) * 128)

    if tile_seq is None:
        # ~4 MiB src block: amortizes per-step overhead; comfortably fits
        # double-buffered (src + out + pe) under v7x's 32 MiB scoped VMEM.
        target_bytes = 4 << 20
        rows = max(1, target_bytes // max(1, lane_pad * dsize))
        tile_seq = min(S, rows)
    tile_seq = max(1, min(int(tile_seq), S))
    if S >= 8:
        tile_seq = max(8, (tile_seq // 8) * 8)       # sublane-friendly ((8,128) rule)
    grid_len = pl.cdiv(S, tile_seq)

    # v7x megacore balance: prefer an even grid length when the grid is >1.
    if grid_len > 1 and grid_len % 2 == 1:
        alt = pl.cdiv(S, grid_len + 1)
        if S >= 8:
            alt = max(8, ((alt + 7) // 8) * 8)
        if 1 <= alt <= S and pl.cdiv(S, alt) % 2 == 0:
            tile_seq = alt
            grid_len = pl.cdiv(S, alt)

    # Padding-aware VMEM accounting: 2x double-buffering of (src, out, pe).
    ts_pad = max(tile_seq, ((tile_seq + 7) // 8) * 8)
    src_blk = ts_pad * lane_pad * dsize
    pe_blk = ts_pad * pe_lane_pad * dsize
    vmem_bytes = 2 * (2 * src_blk + pe_blk) + (1 << 20)

    if vmem_bytes > (28 << 20):
        # A single block is too big even at tile_seq's minimum (S tiny, B*E huge).
        # TODO(synk): tile the flattened (S*B) axis instead of falling back to XLA.
        return xla_add()
    vmem_bytes = int(min(max(vmem_bytes, 4 << 20), 32 << 20))

    cost = pl.CostEstimate(
        flops=S * BE,
        transcendentals=0,
        bytes_accessed=2 * S * BE * dsize + S * E * dsize,
    )

    out2d = pl.pallas_call(
        partial(pe_add_kernel, batch=B),
        out_shape=jax.ShapeDtypeStruct((S, BE), src.dtype),
        grid=(grid_len,),
        in_specs=[
            pl.BlockSpec((tile_seq, BE), lambda i: (i, 0)),   # src: lane-dense, full width
            pl.BlockSpec((tile_seq, E), lambda i: (i, 0)),    # pe:  2D, no singleton sublane
        ],
        out_specs=pl.BlockSpec((tile_seq, BE), lambda i: (i, 0)),
        compiler_params=pltpu.CompilerParams(
            # "parallel": seq-tile loop splits across v7x's 2 TensorCores;
            # neutral on single-TC v5e/v6e.
            dimension_semantics=("parallel",),
            vmem_limit_bytes=vmem_bytes,
        ),
        cost_estimate=cost,
        input_output_aliases=({0: 0} if donate_src else {}),
    )(src2d, pe2d)

    return out2d.reshape(S, B, E)


if __name__ == "__main__":
    key = jax.random.PRNGKey(0)
    k1, k2 = jax.random.split(key)
    max_len = 1024

    # --- Test 1: small shapes consistent with the module: seq=8, batch=2, d_model=32
    S, B, E = 8, 2, 32
    src = jax.random.normal(k1, (S, B, E), dtype=jnp.float32)
    pe_buf = make_pe_buffer(d_model=E, max_len=max_len, dtype=jnp.float32)

    # min_pallas_bytes=0 forces the Pallas kernel even at this tiny size.
    out = positional_encoding_forward(src, pe_buf, min_pallas_bytes=0)
    out = jax.block_until_ready(out)

    ref = src + pe_buf[:S].astype(src.dtype)   # (S,1,E) broadcasts over B
    np.testing.assert_allclose(np.asarray(out), np.asarray(ref), rtol=1e-6, atol=1e-6)

    # --- Test 2: multi-tile pipelining + ragged last tile + bf16 lane-dense path
    S2, B2, E2 = 200, 4, 128
    src2 = jax.random.normal(k2, (S2, B2, E2), dtype=jnp.bfloat16)
    pe_buf2 = make_pe_buffer(d_model=E2, max_len=max_len, dtype=jnp.bfloat16)

    out2 = positional_encoding_forward(src2, pe_buf2, tile_seq=64, min_pallas_bytes=0)
    out2 = jax.block_until_ready(out2)

    ref2 = src2 + pe_buf2[:S2].astype(src2.dtype)
    np.testing.assert_allclose(
        np.asarray(out2, dtype=np.float32),
        np.asarray(ref2, dtype=np.float32),
        rtol=2e-2, atol=2e-2,
    )

    print("KERNEL_OK")
</pallas_src>

<mosaic_0001>
module attributes {stable_mosaic.version = 11 : i64} {
  func.func @pe_add_kernel(%arg0: i32, %arg1: memref<8x64xf32, #tpu.memory_space<vmem>>, %arg2: memref<8x32xf32, #tpu.memory_space<vmem>>, %arg3: memref<8x64xf32, #tpu.memory_space<vmem>>) attributes {dimension_semantics = [#tpu.dimension_semantics<parallel>], iteration_bounds = array<i64: 1>, scalar_prefetch = 0 : i64, scratch_operands = 0 : i64, tpu.core_type = #tpu.core_type<tc>, window_params = [{transform_indices = @transform_0, window_bounds = array<i64: 8, 64>}, {transform_indices = @transform_1, window_bounds = array<i64: 8, 32>}, {transform_indices = @transform_2, window_bounds = array<i64: 8, 64>}]} {
    %c0 = arith.constant 0 : index
    %c0_0 = arith.constant 0 : index
    %0 = vector.load %arg2[%c0, %c0_0] : memref<8x32xf32, #tpu.memory_space<vmem>>, vector<8x32xf32>
    %1 = tpu.concatenate %0, %0 in 1 : vector<8x32xf32>, vector<8x32xf32> -> vector<8x64xf32>
    %c0_1 = arith.constant 0 : index
    %c0_2 = arith.constant 0 : index
    %2 = vector.load %arg1[%c0_1, %c0_2] : memref<8x64xf32, #tpu.memory_space<vmem>>, vector<8x64xf32>
    %3 = arith.addf %2, %1 : vector<8x64xf32>
    %c0_3 = arith.constant 0 : index
    %c0_4 = arith.constant 0 : index
    %4 = vector.load %arg3[%c0_3, %c0_4] : memref<8x64xf32, #tpu.memory_space<vmem>>, vector<8x64xf32>
    tpu.vector_store %arg3[%c0_3, %c0_4], %3 {strides = array<i32>} : memref<8x64xf32, #tpu.memory_space<vmem>>, vector<8x64xf32>,
    return
  }
  func.func @transform_0(%arg0: i32) -> (i32, i32) {
    %c0_i32 = arith.constant 0 : i32
    %c0_i32_0 = arith.constant 0 : i32
    return %arg0, %c0_i32 : i32, i32
  }
  func.func @transform_1(%arg0: i32) -> (i32, i32) {
    %c0_i32 = arith.constant 0 : i32
    %c0_i32_0 = arith.constant 0 : i32
    return %arg0, %c0_i32 : i32, i32
  }
  func.func @transform_2(%arg0: i32) -> (i32, i32) {
    %c0_i32 = arith.constant 0 : i32
    %c0_i32_0 = arith.constant 0 : i32
    return %arg0, %c0_i32 : i32, i32
  }
}

</mosaic_0001>

<llo_original>
// kernel: tpu_custom_call.1
$region0: #{tpu_custom_call.1}
  #allocation0 [shape = 'u32[]', space=smem, size = 0x4, offset = 0x4, fixed_abs, tag = 'smem constant byte address 0x4 - core index']
  #allocation1 [shape = 'u32[72,128]{1,0:T(1,128)}', space=vmem, size = 0x9000, scoped, tag = 'internal scratch']
  %s0 = inlined_call_operand.hbm [shape: f32[8,64], index: 0, kind: input, shape index: {}]
  %s1 = inlined_call_operand.hbm [shape: f32[8,32], index: 1, kind: input, shape index: {}]
  %s2 = inlined_call_operand.hbm [shape: f32[8,64], index: 2, kind: output, shape index: {}]
  %s3 = sld [smem:[#allocation0]]
  $region26: #{tpu_custom_call.1} parent=0
    _
  %s5 = ssub.s32 1, %s3
  %s6 = scalar_select 0, %s5, %s3
  $region1: #{tpu_custom_call.1} parent=0
    #allocation2 [shape = 'u8[4096]{0}', space=vmem, size = 0x1000, scoped, tag = 'input window, operand 0, single buffered']
    #allocation3 [shape = 's32[1]{0}', space=sflag, size = 0x4, scoped, tag = 'scoped memory for tpu_custom_call.1']
    #allocation4 [shape = 's32[1]{0}', space=sflag, size = 0x4, scoped, tag = 'scoped memory for tpu_custom_call.1']
    #allocation5 [shape = 'u8[4096]{0}', space=vmem, size = 0x1000, scoped, tag = 'input window, operand 1, single buffered']
    #allocation6 [shape = 's32[1]{0}', space=sflag, size = 0x4, scoped, tag = 'scoped memory for tpu_custom_call.1']
    #allocation7 [shape = 'u8[4096]{0}', space=vmem, size = 0x1000, scoped, tag = 'output window, operand 0, single buffered']
    %7 = vsyncpa [#allocation3], 0
    %8 = vsyncpa [#allocation6], 0
    %9 = vsyncpa [#allocation4], 0
    // Predicated region
    $region2: #{tpu_custom_call.1} parent=1 // pred_check
      _
    $region3: #{tpu_custom_call.1} parent=1 // pred_check_branch
      %11 = sbr.rel (0) target = $region5
    $region4: #{tpu_custom_call.1} parent=1 // pred_region
      %13 = vsyncadd [#allocation3], 0
      %s15 = sshll.u32 %s0, 4
      %s16 = int_to_ptr.hbm [resolvable:$true] %s15
      %s17 = sshll.u32 [#allocation2], 4
      %s18 = int_to_ptr.vmem [resolvable:$true] %s17
      %20 = dma.hbm_to_vmem [thread:$0]  %s16, 128, %s18, [#allocation3]
    $region5: #{tpu_custom_call.1} parent=1 // pred_fallthru
      _
    // Predicated region
    $region6: #{tpu_custom_call.1} parent=1 // pred_check
      _
    $region7: #{tpu_custom_call.1} parent=1 // pred_check_branch
      %22 = sbr.rel (0) target = $region9
    $region8: #{tpu_custom_call.1} parent=1 // pred_region
      %24 = vsyncadd [#allocation6], 0
      %s26 = sshll.u32 %s1, 4
      %s27 = int_to_ptr.hbm [resolvable:$true] %s26
      %s28 = sshll.u32 [#allocation5], 4
      %s29 = int_to_ptr.vmem [resolvable:$true] %s28
      %31 = dma.hbm_to_vmem [thread:$0]  %s27, 128, %s29, [#allocation6]
    $region9: #{tpu_custom_call.1} parent=1 // pred_fallthru
      _
    // Predicated region
    $region10: #{tpu_custom_call.1} parent=1 // pred_check
      _
    $region11: #{tpu_custom_call.1} parent=1 // pred_check_branch
      %33 = sbr.rel (0) target = $region13
    $region12: #{tpu_custom_call.1} parent=1 // pred_region
      %35 = dma.done [#allocation3], 128
    $region13: #{tpu_custom_call.1} parent=1 // pred_fallthru
      _
    // Predicated region
    $region14: #{tpu_custom_call.1} parent=1 // pred_check
      _
    $region15: #{tpu_custom_call.1} parent=1 // pred_check_branch
      %37 = sbr.rel (0) target = $region17
    $region16: #{tpu_custom_call.1} parent=1 // pred_region
      %39 = dma.done [#allocation6], 128
    $region17: #{tpu_custom_call.1} parent=1 // pred_fallthru
      _
    %v40 = vld [vmem:[#allocation5] sm:$0xff]
    %42 = vrot.lane.b32.xlu0 %v40, 32
    %v43 = vpop.permute.xlu0 %42
    %vm45 = vcmask 261120
    %v46 = vsel %vm45, %v40, %v43
    %v47 = vld [vmem:[#allocation2] sm:$0xff]
    %v48 = vadd.f32 %v47, %v46
    %vm49 = vcmask 523264
    %50 = vst.msk [vmem:[#allocation7] sm:$0xff] %vm49, %v48
    // Predicated region
    $region18: #{tpu_custom_call.1} parent=1 // pred_check
      _
    $region19: #{tpu_custom_call.1} parent=1 // pred_check_branch
      %52 = sbr.rel (0) target = $region21
    $region20: #{tpu_custom_call.1} parent=1 // pred_region
      %54 = vsyncadd [#allocation4], 0
      %s56 = sshll.u32 [#allocation7], 4
      %s57 = int_to_ptr.vmem [resolvable:$true] %s56
      %s58 = sshll.u32 %s2, 4
      %s59 = int_to_ptr.hbm [resolvable:$true] %s58
      %61 = dma.vmem_to_hbm [thread:$0]  %s57, 128, %s59, [#allocation4]
    $region21: #{tpu_custom_call.1} parent=1 // pred_fallthru
      _
    // Predicated region
    $region22: #{tpu_custom_call.1} parent=1 // pred_check
      _
    $region23: #{tpu_custom_call.1} parent=1 // pred_check_branch
      %63 = sbr.rel (0) target = $region25
    $region24: #{tpu_custom_call.1} parent=1 // pred_region
      %65 = dma.done [#allocation4], 128
    $region25: #{tpu_custom_call.1} parent=1 // pred_fallthru
      _
    %66 = vsyncpa [#allocation3], 1
    %67 = vsyncpa [#allocation6], 1
    %68 = vsyncpa [#allocation4], 1

</llo_original>
